<compile_context>
chip_gen: v7x
topology: tpu7x:2x2x1
jax: 0.10.0
libtpu: 0.0.40
codegen_flags: <defaults>
</compile_context>

<pallas_src>
import functools

import jax
import jax.numpy as jnp
from jax.experimental import pallas as pl
from jax.experimental.pallas import tpu as pltpu


def _focal_kernel(x_ref, t_ref, w_ref, o_ref, loss_acc, wsum_acc, *,
                  gamma, ignore_index, n_valid):
    i = pl.program_id(0)
    n_tiles = pl.num_programs(0)

    @pl.when(i == 0)
    def _():
        loss_acc[...] = jnp.zeros_like(loss_acc)
        wsum_acc[...] = jnp.zeros_like(wsum_acc)

    x = x_ref[...].astype(jnp.float32)              # (TILE_N, C)
    t = t_ref[...]                                  # (TILE_N, 1) int32
    tn, c = x.shape

    # row-wise log-softmax (reductions over the lane axis C)
    m = jnp.max(x, axis=1, keepdims=True)                        # (TILE_N, 1)
    z = x - m
    lse = jnp.log(jnp.sum(jnp.exp(z), axis=1, keepdims=True))    # (TILE_N, 1)

    # gather the target column via a one-hot select (pure VPU, no gather op)
    lane = jax.lax.broadcasted_iota(jnp.int32, (tn, c), 1)
    onehot = lane == t                                           # (TILE_N, C)
    z_t = jnp.sum(jnp.where(onehot, z, 0.0), axis=1, keepdims=True)
    logpt = z_t - lse                                            # log p_target
    pt = jnp.exp(logpt)

    omp = 1.0 - pt
    if float(gamma) == 2.0:          # specialize common gammas to VPU multiplies
        focal = omp * omp
    elif float(gamma) == 1.0:
        focal = omp
    elif float(gamma) == 0.0:
        focal = jnp.ones_like(omp)
    else:
        focal = omp ** jnp.float32(gamma)
    mod = focal * logpt                                          # (TILE_N, 1)

    # per-row class weight, masked for ignore_index and padded rows
    w_row = jnp.sum(jnp.where(onehot, w_ref[...], 0.0), axis=1, keepdims=True)
    row = jax.lax.broadcasted_iota(jnp.int32, (tn, 1), 0) + i * tn
    valid = (t != jnp.int32(ignore_index)) & (row < n_valid)
    w_row = jnp.where(valid, w_row, 0.0)

    # elementwise accumulation each step; cross-sublane reduce only in epilogue
    loss_acc[...] += w_row * mod
    wsum_acc[...] += w_row

    @pl.when(i == n_tiles - 1)
    def _():
        total = jnp.sum(loss_acc[...])
        denom = jnp.sum(wsum_acc[...])
        o_ref[...] = jnp.reshape(-total / denom, (1, 1))


def _focal_loss_ref(inputs, target, *, gamma=2.0, weight=None, ignore_index=-100):
    """Pure-jnp reference / small-problem fast path (same semantics)."""
    x = inputs.astype(jnp.float32)
    n, c = x.shape
    logpt = jax.nn.log_softmax(x, axis=1)
    pt = jnp.exp(logpt)
    mod = (1.0 - pt) ** jnp.float32(gamma) * logpt
    w = jnp.ones((c,), jnp.float32) if weight is None else jnp.asarray(weight, jnp.float32)
    valid = target != ignore_index
    t_safe = jnp.where(valid, target, 0).astype(jnp.int32)
    picked = jnp.take_along_axis(mod, t_safe[:, None], axis=1)[:, 0]
    w_t = jnp.where(valid, w[t_safe], 0.0)
    return -jnp.sum(w_t * picked) / jnp.sum(w_t)


def focal_loss(inputs, target, *, gamma=2.0, weight=None, ignore_index=-100,
               tile_n=None, use_pallas=None):
    """JAX/Pallas equivalent of FocalLoss.forward (mean-reduced nll_loss)."""
    n, c = inputs.shape
    if use_pallas is None:
        use_pallas = n * c >= 4096      # kernel launch overhead dominates tiny sizes
    if not use_pallas:
        return _focal_loss_ref(inputs, target, gamma=gamma, weight=weight,
                               ignore_index=ignore_index)

    x = inputs.astype(jnp.float32)
    t = target.astype(jnp.int32)
    w = (jnp.ones((c,), jnp.float32) if weight is None
         else jnp.asarray(weight, jnp.float32))

    c_pad = ((c + 127) // 128) * 128            # lane padding of one block
    if tile_n is None:
        # ~2 MiB of f32 per input block: double-buffered it stays well under
        # v7x's 64 MiB VMEM and the 32 MiB scoped default.
        tile_n = (2 * 1024 * 1024) // (4 * c_pad)
        tile_n = max(8, min(1024, (tile_n // 8) * 8))
    tile_n = max(8, (int(tile_n) // 8) * 8)
    tile_n = min(tile_n, ((n + 7) // 8) * 8)    # do not tile past the data

    n_pad = ((n + tile_n - 1) // tile_n) * tile_n
    if n_pad > n:
        x = jnp.pad(x, ((0, n_pad - n), (0, 0)))
        t = jnp.pad(t, (0, n_pad - n), constant_values=ignore_index)
    t2 = t.reshape(n_pad, 1)
    w2 = w.reshape(1, c)
    n_tiles = n_pad // tile_n

    # explicit VMEM budget: double-buffered input+target blocks, weights, scratch
    blk_in = tile_n * c_pad * 4
    blk_tg = tile_n * 128 * 4
    blk_w = 8 * c_pad * 4
    scratch = 2 * tile_n * 128 * 4
    est = 2 * (blk_in + blk_tg) + blk_w + scratch
    vmem_limit = int(min(max(4 * est, 16 * 1024 * 1024), 48 * 1024 * 1024))

    kernel = functools.partial(_focal_kernel, gamma=float(gamma),
                               ignore_index=int(ignore_index), n_valid=int(n))

    out = pl.pallas_call(
        kernel,
        out_shape=jax.ShapeDtypeStruct((1, 1), jnp.float32),
        grid=(n_tiles,),
        in_specs=[
            pl.BlockSpec((tile_n, c), lambda i: (i, 0)),   # logits tile
            pl.BlockSpec((tile_n, 1), lambda i: (i, 0)),   # targets tile
            pl.BlockSpec((1, c), lambda i: (0, 0)),        # class weights (resident)
        ],
        out_specs=pl.BlockSpec((1, 1), lambda i: (0, 0)),  # written only on last step
        scratch_shapes=[pltpu.VMEM((tile_n, 1), jnp.float32),
                        pltpu.VMEM((tile_n, 1), jnp.float32)],
        compiler_params=pltpu.CompilerParams(
            dimension_semantics=("arbitrary",),            # cross-tile accumulation
            vmem_limit_bytes=vmem_limit),
    )(x, t2, w2)
    return out[0, 0]


if __name__ == "__main__":
    key = jax.random.PRNGKey(0)
    k1, k2, k3, k4, k5 = jax.random.split(key, 5)

    # case 1: small [N, C], defaults (gamma=2, no weight), one ignored row
    N, C = 8, 4
    inputs = jax.random.normal(k1, (N, C), dtype=jnp.float32)
    target = jax.random.randint(k2, (N,), 0, C, dtype=jnp.int32)
    target = target.at[3].set(-100)                      # exercise ignore_index
    loss = focal_loss(inputs, target, gamma=2, use_pallas=True)
    loss = jax.block_until_ready(loss)
    ref = _focal_loss_ref(inputs, target, gamma=2)
    assert jnp.allclose(loss, ref, rtol=1e-4, atol=1e-5), (loss, ref)

    # case 2: per-class weights + non-integer gamma
    weight = jax.random.uniform(k3, (C,), dtype=jnp.float32) + 0.5
    loss_w = focal_loss(inputs, target, gamma=1.5, weight=weight, use_pallas=True)
    loss_w = jax.block_until_ready(loss_w)
    ref_w = _focal_loss_ref(inputs, target, gamma=1.5, weight=weight)
    assert jnp.allclose(loss_w, ref_w, rtol=1e-4, atol=1e-5), (loss_w, ref_w)

    # case 3: multi-tile grid with row padding (N=200 -> 4 tiles of 64 rows)
    N2, C2 = 200, 16
    inputs2 = jax.random.normal(k4, (N2, C2), dtype=jnp.float32)
    target2 = jax.random.randint(k5, (N2,), 0, C2, dtype=jnp.int32)
    target2 = target2.at[7].set(-100)
    loss2 = focal_loss(inputs2, target2, gamma=2, tile_n=64, use_pallas=True)
    loss2 = jax.block_until_ready(loss2)
    ref2 = _focal_loss_ref(inputs2, target2, gamma=2)
    assert jnp.allclose(loss2, ref2, rtol=1e-4, atol=1e-5), (loss2, ref2)

    print("KERNEL_OK")
</pallas_src>

<mosaic_0001>
module attributes {stable_mosaic.version = 11 : i64} {
  func.func @_focal_kernel(%arg0: i32, %arg1: memref<8x4xf32, #tpu.memory_space<vmem>>, %arg2: memref<8x1xi32, #tpu.memory_space<vmem>>, %arg3: memref<1x4xf32, #tpu.memory_space<vmem>>, %arg4: memref<1x1xf32, #tpu.memory_space<vmem>>, %arg5: memref<8x1xf32, #tpu.memory_space<vmem>>, %arg6: memref<8x1xf32, #tpu.memory_space<vmem>>) attributes {dimension_semantics = [#tpu.dimension_semantics<arbitrary>], iteration_bounds = array<i64: 1>, scalar_prefetch = 0 : i64, scratch_operands = 2 : i64, tpu.core_type = #tpu.core_type<tc>, window_params = [{transform_indices = @transform_0, window_bounds = array<i64: 8, 4>}, {transform_indices = @transform_1, window_bounds = array<i64: 8, 1>}, {pipeline_mode = #tpu.pipeline_mode<synchronous>, transform_indices = @transform_2, window_bounds = array<i64: 1, 4>}, {pipeline_mode = #tpu.pipeline_mode<synchronous>, transform_indices = @transform_3, window_bounds = array<i64: 1, 1>}]} {
    %c0_i32 = arith.constant 0 : i32
    %0 = arith.cmpi eq, %arg0, %c0_i32 : i32
    %1 = arith.extui %0 : i1 to i32
    %c0_i32_0 = arith.constant 0 : i32
    %2 = arith.cmpi ne, %1, %c0_i32_0 : i32
    scf.if %2 {
      %cst_24 = arith.constant 0.000000e+00 : f32
      %54 = vector.broadcast %cst_24 : f32 to vector<8x1xf32>
      %c0_25 = arith.constant 0 : index
      %c0_26 = arith.constant 0 : index
      %55 = vector.load %arg5[%c0_25, %c0_26] : memref<8x1xf32, #tpu.memory_space<vmem>>, vector<8x1xf32>
      tpu.vector_store %arg5[%c0_25, %c0_26], %54 {strides = array<i32>} : memref<8x1xf32, #tpu.memory_space<vmem>>, vector<8x1xf32>,
      %cst_27 = arith.constant 0.000000e+00 : f32
      %56 = vector.broadcast %cst_27 : f32 to vector<8x1xf32>
      %c0_28 = arith.constant 0 : index
      %c0_29 = arith.constant 0 : index
      %57 = vector.load %arg6[%c0_28, %c0_29] : memref<8x1xf32, #tpu.memory_space<vmem>>, vector<8x1xf32>
      tpu.vector_store %arg6[%c0_28, %c0_29], %56 {strides = array<i32>} : memref<8x1xf32, #tpu.memory_space<vmem>>, vector<8x1xf32>,
    } else {
    }
    %c0 = arith.constant 0 : index
    %c0_1 = arith.constant 0 : index
    %3 = vector.load %arg1[%c0, %c0_1] : memref<8x4xf32, #tpu.memory_space<vmem>>, vector<8x4xf32>
    %c0_2 = arith.constant 0 : index
    %c0_3 = arith.constant 0 : index
    %4 = vector.load %arg2[%c0_2, %c0_3] : memref<8x1xi32, #tpu.memory_space<vmem>>, vector<8x1xi32>
    %cst = arith.constant dense<0xFF800000> : vector<8xf32>
    %5 = vector.multi_reduction <maximumf>, %3, %cst [1] : vector<8x4xf32> to vector<8xf32>
    %6 = vector.shape_cast %5 : vector<8xf32> to vector<8x1xf32>
    %7 = vector.broadcast %6 : vector<8x1xf32> to vector<8x4xf32>
    %8 = arith.subf %3, %7 : vector<8x4xf32>
    %9 = math.exp %8 : vector<8x4xf32>
    %cst_4 = arith.constant dense<0.000000e+00> : vector<8xf32>
    %10 = vector.multi_reduction <add>, %9, %cst_4 [1] : vector<8x4xf32> to vector<8xf32>
    %11 = vector.shape_cast %10 : vector<8xf32> to vector<8x1xf32>
    %12 = math.log %11 : vector<8x1xf32>
    %13 = tpu.iota {dimensions = array<i32: 1>} : vector<8x4xi32>
    %14 = vector.broadcast %4 : vector<8x1xi32> to vector<8x4xi32>
    %15 = arith.cmpi eq, %13, %14 : vector<8x4xi32>
    %cst_5 = arith.constant 0.000000e+00 : f32
    %16 = vector.broadcast %cst_5 : f32 to vector<8x4xf32>
    %17 = arith.select %15, %8, %16 : vector<8x4xi1>, vector<8x4xf32>
    %cst_6 = arith.constant dense<0.000000e+00> : vector<8xf32>
    %18 = vector.multi_reduction <add>, %17, %cst_6 [1] : vector<8x4xf32> to vector<8xf32>
    %19 = vector.shape_cast %18 : vector<8xf32> to vector<8x1xf32>
    %20 = arith.subf %19, %12 : vector<8x1xf32>
    %21 = math.exp %20 : vector<8x1xf32>
    %cst_7 = arith.constant 1.000000e+00 : f32
    %22 = vector.broadcast %cst_7 : f32 to vector<8x1xf32>
    %23 = arith.subf %22, %21 : vector<8x1xf32>
    %24 = arith.mulf %23, %23 : vector<8x1xf32>
    %25 = arith.mulf %24, %20 : vector<8x1xf32>
    %c0_8 = arith.constant 0 : index
    %c0_9 = arith.constant 0 : index
    %26 = vector.load %arg3[%c0_8, %c0_9] : memref<1x4xf32, #tpu.memory_space<vmem>>, vector<1x4xf32>
    %cst_10 = arith.constant 0.000000e+00 : f32
    %27 = vector.shape_cast %26 : vector<1x4xf32> to vector<1x4xf32>
    %28 = vector.broadcast %27 : vector<1x4xf32> to vector<8x4xf32>
    %29 = vector.broadcast %cst_10 : f32 to vector<8x4xf32>
    %30 = arith.select %15, %28, %29 : vector<8x4xi1>, vector<8x4xf32>
    %cst_11 = arith.constant dense<0.000000e+00> : vector<8xf32>
    %31 = vector.multi_reduction <add>, %30, %cst_11 [1] : vector<8x4xf32> to vector<8xf32>
    %32 = vector.shape_cast %31 : vector<8xf32> to vector<8x1xf32>
    %33 = tpu.iota {dimensions = array<i32: 0>} : vector<8x1xi32>
    %c8_i32 = arith.constant 8 : i32
    %34 = arith.muli %arg0, %c8_i32 : i32
    %35 = vector.broadcast %34 : i32 to vector<8x1xi32>
    %36 = arith.addi %33, %35 : vector<8x1xi32>
    %c-100_i32 = arith.constant -100 : i32
    %37 = vector.broadcast %c-100_i32 : i32 to vector<8x1xi32>
    %38 = arith.cmpi ne, %4, %37 : vector<8x1xi32>
    %c8_i32_12 = arith.constant 8 : i32
    %39 = vector.broadcast %c8_i32_12 : i32 to vector<8x1xi32>
    %40 = arith.cmpi slt, %36, %39 : vector<8x1xi32>
    %41 = arith.andi %38, %40 : vector<8x1xi1>
    %cst_13 = arith.constant 0.000000e+00 : f32
    %42 = vector.broadcast %cst_13 : f32 to vector<8x1xf32>
    %43 = arith.select %41, %32, %42 : vector<8x1xi1>, vector<8x1xf32>
    %c0_14 = arith.constant 0 : index
    %c0_15 = arith.constant 0 : index
    %44 = vector.load %arg5[%c0_14, %c0_15] : memref<8x1xf32, #tpu.memory_space<vmem>>, vector<8x1xf32>
    %45 = arith.mulf %43, %25 : vector<8x1xf32>
    %46 = arith.addf %44, %45 : vector<8x1xf32>
    %c0_16 = arith.constant 0 : index
    %c0_17 = arith.constant 0 : index
    %47 = vector.load %arg5[%c0_16, %c0_17] : memref<8x1xf32, #tpu.memory_space<vmem>>, vector<8x1xf32>
    tpu.vector_store %arg5[%c0_16, %c0_17], %46 {strides = array<i32>} : memref<8x1xf32, #tpu.memory_space<vmem>>, vector<8x1xf32>,
    %c0_18 = arith.constant 0 : index
    %c0_19 = arith.constant 0 : index
    %48 = vector.load %arg6[%c0_18, %c0_19] : memref<8x1xf32, #tpu.memory_space<vmem>>, vector<8x1xf32>
    %49 = arith.addf %48, %43 : vector<8x1xf32>
    %c0_20 = arith.constant 0 : index
    %c0_21 = arith.constant 0 : index
    %50 = vector.load %arg6[%c0_20, %c0_21] : memref<8x1xf32, #tpu.memory_space<vmem>>, vector<8x1xf32>
    tpu.vector_store %arg6[%c0_20, %c0_21], %49 {strides = array<i32>} : memref<8x1xf32, #tpu.memory_space<vmem>>, vector<8x1xf32>,
    %c0_i32_22 = arith.constant 0 : i32
    %51 = arith.cmpi eq, %arg0, %c0_i32_22 : i32
    %52 = arith.extui %51 : i1 to i32
    %c0_i32_23 = arith.constant 0 : i32
    %53 = arith.cmpi ne, %52, %c0_i32_23 : i32
    scf.if %53 {
      %c0_24 = arith.constant 0 : index
      %c0_25 = arith.constant 0 : index
      %54 = vector.load %arg5[%c0_24, %c0_25] : memref<8x1xf32, #tpu.memory_space<vmem>>, vector<8x1xf32>
      %55 = vector.shape_cast %54 : vector<8x1xf32> to vector<1x8x1xf32>
      %cst_26 = arith.constant dense<0.000000e+00> : vector<1xf32>
      %56 = vector.multi_reduction <add>, %55, %cst_26 [1, 2] : vector<1x8x1xf32> to vector<1xf32>
      %57 = vector.shape_cast %56 : vector<1xf32> to vector<1x1x1xf32>
      %58 = vector.extract %57[0, 0, 0] : f32 from vector<1x1x1xf32>
      %c0_27 = arith.constant 0 : index
      %c0_28 = arith.constant 0 : index
      %59 = vector.load %arg6[%c0_27, %c0_28] : memref<8x1xf32, #tpu.memory_space<vmem>>, vector<8x1xf32>
      %60 = vector.shape_cast %59 : vector<8x1xf32> to vector<1x8x1xf32>
      %cst_29 = arith.constant dense<0.000000e+00> : vector<1xf32>
      %61 = vector.multi_reduction <add>, %60, %cst_29 [1, 2] : vector<1x8x1xf32> to vector<1xf32>
      %62 = vector.shape_cast %61 : vector<1xf32> to vector<1x1x1xf32>
      %63 = vector.extract %62[0, 0, 0] : f32 from vector<1x1x1xf32>
      %cst_30 = arith.constant 0.000000e+00 : f32
      %64 = arith.subf %cst_30, %58 : f32
      %65 = arith.divf %64, %63 : f32
      %66 = vector.broadcast %65 : f32 to vector<1x1xf32>
      %c0_31 = arith.constant 0 : index
      %c0_32 = arith.constant 0 : index
      %67 = vector.load %arg4[%c0_31, %c0_32] : memref<1x1xf32, #tpu.memory_space<vmem>>, vector<1x1xf32>
      tpu.vector_store %arg4[%c0_31, %c0_32], %66 {strides = array<i32>} : memref<1x1xf32, #tpu.memory_space<vmem>>, vector<1x1xf32>,
    } else {
    }
    return
  }
  func.func @transform_0(%arg0: i32) -> (i32, i32) {
    %c0_i32 = arith.constant 0 : i32
    %c0_i32_0 = arith.constant 0 : i32
    return %arg0, %c0_i32 : i32, i32
  }
  func.func @transform_1(%arg0: i32) -> (i32, i32) {
    %c0_i32 = arith.constant 0 : i32
    %c0_i32_0 = arith.constant 0 : i32
    return %arg0, %c0_i32 : i32, i32
  }
  func.func @transform_2(%arg0: i32) -> (i32, i32) {
    %c0_i32 = arith.constant 0 : i32
    %c0_i32_0 = arith.constant 0 : i32
    %c0_i32_1 = arith.constant 0 : i32
    return %c0_i32, %c0_i32_0 : i32, i32
  }
  func.func @transform_3(%arg0: i32) -> (i32, i32) {
    %c0_i32 = arith.constant 0 : i32
    %c0_i32_0 = arith.constant 0 : i32
    %c0_i32_1 = arith.constant 0 : i32
    return %c0_i32, %c0_i32_0 : i32, i32
  }
}

</mosaic_0001>

<llo_original>
// kernel: tpu_custom_call.1
$region0: #{tpu_custom_call.1}
  #allocation0 [shape = 'u32[]', space=smem, size = 0x4, offset = 0x4, fixed_abs, tag = 'smem constant byte address 0x4 - core index']
  #allocation1 [shape = 'u32[144,128]{1,0:T(1,128)}', space=vmem, size = 0x12000, scoped, tag = 'internal scratch']
  #allocation2 [shape = 'f32[8,1]{1,0:T(8,128)}', space=vmem, size = 0x1000, scoped, tag = 'scratch operand']
  #allocation3 [shape = 'f32[8,1]{1,0:T(8,128)}', space=vmem, size = 0x1000, scoped, tag = 'scratch operand']
  %s0 = inlined_call_operand.vmem [shape: f32[8,4], index: 0, kind: input, shape index: {}]
  %s1 = inlined_call_operand.vmem [shape: s32[8,1], index: 1, kind: input, shape index: {}]
  %s2 = inlined_call_operand.vmem [shape: f32[1,4], index: 2, kind: input, shape index: {}]
  %s3 = inlined_call_operand.hbm [shape: f32[1,1], index: 3, kind: output, shape index: {}]
  %s4 = sld [smem:[#allocation0]]
  $region30: #{tpu_custom_call.1} parent=0
    _
  %s6 = ssub.s32 1, %s4
  %s7 = scalar_select 0, %s6, %s4
  $region1: #{tpu_custom_call.1} parent=0
    #allocation4 [shape = 'u8[512]{0}', space=vmem, size = 0x400, scoped, tag = 'output window, operand 0, single buffered']
    #allocation5 [shape = 's32[1]{0}', space=sflag, size = 0x4, scoped, tag = 'scoped memory for tpu_custom_call.1']
    %8 = vsyncpa [#allocation5], 0
    // Predicated region
    $region2: #{tpu_custom_call.1} parent=1 // pred_check
      _
    $region3: #{tpu_custom_call.1} parent=1 // pred_check_branch
      %10 = sbr.rel (0) target = $region5
    $region4: #{tpu_custom_call.1} parent=1 // pred_region
      _
    $region5: #{tpu_custom_call.1} parent=1 // pred_fallthru
      _
    // Predicated region
    $region6: #{tpu_custom_call.1} parent=1 // pred_check
      _
    $region7: #{tpu_custom_call.1} parent=1 // pred_check_branch
      %12 = sbr.rel (0) target = $region9
    $region8: #{tpu_custom_call.1} parent=1 // pred_region
      _
    $region9: #{tpu_custom_call.1} parent=1 // pred_fallthru
      _
    // Predicated region
    $region10: #{tpu_custom_call.1} parent=1 // pred_check
      _
    $region11: #{tpu_custom_call.1} parent=1 // pred_check_branch
      %14 = sbr.rel (0) target = $region13
    $region12: #{tpu_custom_call.1} parent=1 // pred_region
      _
    $region13: #{tpu_custom_call.1} parent=1 // pred_fallthru
      _
    %p15 = scmp.eq.s32.totalorder 0, 0
    // Predicated region
    $region14: #{tpu_custom_call.1} parent=1 // pred_check
      %p16 = pneg %p15
    $region15: #{tpu_custom_call.1} parent=1 // pred_check_branch
      %18 = sbr.rel (%p16) target = $region17
    $region16: #{tpu_custom_call.1} parent=1 // pred_region
      %vm19 = vcmask 7168
      %20 = vst.msk [vmem:[#allocation2] sm:$0xff] %vm19, 0.0
      %21 = vst.msk [vmem:[#allocation3] sm:$0xff] %vm19, 0.0
    $region17: #{tpu_custom_call.1} parent=1 // pred_fallthru
      _
    %v22 = vld [vmem:[%s0] sm:$0xff]
    %v23 = vld [vmem:[%s1] sm:$0xff]
    %vm24 = vcmask 31744
    %v25 = vsel %vm24, %v22, -inf
    %26 = vmax.xlane.f32.xlu0 %v25
    %v27 = vpop.xlane.xlu0 %26
    %v28 = vsub.f32 %v22, %v27
    %v29 = vmul.f32 %v28, 1.442695
    %v30 = vpow.pop %v29
    %v31 = vsel %vm24, %v30, 0.0
    %32 = vadd.xlane.f32.xlu0 %v31
    %v33 = vpop.xlane.xlu0 %32
    %v34 = vlog2.pop %v33
    %v35 = vmul.f32 %v34, 0.6931472
    %v36 = vlaneseq
    %v37 = vand.u32 %v36, 127
    %38 = vset.pattern.permute.xlu0 0
    %39 = vperm.xlu0 %38, %v23
    %v40 = vpop.permute.xlu0 %39
    %vm41 = vcmp.eq.s32.totalorder %v37, %v40
    %v42 = vsel %vm41, %v28, 0.0
    %v43 = vsel %vm24, %v42, 0.0
    %44 = vadd.xlane.f32.xlu0 %v43
    %v45 = vpop.xlane.xlu0 %44
    %v46 = vsub.f32 %v45, %v35
    %v47 = vmul.f32 %v46, 1.442695
    %v48 = vpow.pop %v47
    %v49 = vsub.f32 1.0, %v48
    %v50 = vmul.f32 %v49, %v49
    %v51 = vmul.f32 %v50, %v46
    %v52 = vld [vmem:[%s2] sm:$0x1]
    %v54 = vlaneseq
    %v55 = vshrl.u32 %v54, 7
    %v56 = vsub.s32 0, %v55
    %v57 = vrot.slane %v52, %v56
    %v59 = vsel %vm41, %v57, 0.0
    %v60 = vsel %vm24, %v59, 0.0
    %61 = vadd.xlane.f32.xlu0 %v60
    %v62 = vpop.xlane.xlu0 %61
    %v63 = vlaneseq
    %v64 = vshrl.u32 %v63, 7
    %s65 = smul.u32 0, 8
    %v66 = vstv %s65
    %v67 = vadd.s32 %v64, %v66
    %vm68 = vcmp.ne.s32.totalorder %v23, 4294967196
    %vm69 = vcmp.lt.s32.totalorder %v67, 8
    %vm70 = vmand %vm68, %vm69
    %v71 = vsel %vm70, %v62, 0.0
    %v72 = vld [vmem:[#allocation2] sm:$0xff]
    %v73 = vmul.f32 %v71, %v51
    %v74 = vadd.f32 %v72, %v73
    %vm75 = vcmask 7168
    %76 = vst.msk [vmem:[#allocation2] sm:$0xff] %vm75, %v74
    %v77 = vld [vmem:[#allocation3] sm:$0xff]
    %v78 = vadd.f32 %v77, %v71
    %79 = vst.msk [vmem:[#allocation3] sm:$0xff] %vm75, %v78
    // Predicated region
    $region18: #{tpu_custom_call.1} parent=1 // pred_check
      %p80 = pneg %p15
    $region19: #{tpu_custom_call.1} parent=1 // pred_check_branch
      %82 = sbr.rel (%p80) target = $region21
    $region20: #{tpu_custom_call.1} parent=1 // pred_region
      %v83 = vld [vmem:[#allocation2] sm:$0xff]
      %v84 = vsel %vm75, %v83, 0.0
      %85 = vadd.xlane.f32.xlu0 %v84
      %v86 = vpop.xlane.xlu0 %85
      %v87 = vrot.slane %v86, 4
      %v88 = vadd.f32 %v86, %v87
      %v89 = vrot.slane %v88, 2
      %v90 = vadd.f32 %v88, %v89
      %v91 = vrot.slane %v90, 1
      %v92 = vadd.f32 %v90, %v91
      %s93 = vtos %v92
      %v94 = vld [vmem:[#allocation3] sm:$0xff]
      %v95 = vsel %vm75, %v94, 0.0
      %96 = vadd.xlane.f32.xlu0 %v95
      %v97 = vpop.xlane.xlu0 %96
      %v98 = vrot.slane %v97, 4
      %v99 = vadd.f32 %v97, %v98
      %v100 = vrot.slane %v99, 2
      %v101 = vadd.f32 %v99, %v100
      %v102 = vrot.slane %v101, 1
      %v103 = vadd.f32 %v101, %v102
      %s104 = vtos %v103
      %s105 = ssub.f32 0.0, %s93
      %v106 = vstv %s104
      %v107 = vrcp.pop %v106
      %s108 = vtos %v107
      %s109 = smul.f32 %s105, %s108
      %v110 = vstv %s109
      %vm111 = vcmask 0
      %112 = vst.msk [vmem:[#allocation4] sm:$0x1] %vm111, %v110
    $region21: #{tpu_custom_call.1} parent=1 // pred_fallthru
      _
    // Predicated region
    $region22: #{tpu_custom_call.1} parent=1 // pred_check
      _
    $region23: #{tpu_custom_call.1} parent=1 // pred_check_branch
      %114 = sbr.rel (0) target = $region25
    $region24: #{tpu_custom_call.1} parent=1 // pred_region
      %s116 = ssub.s32 16, 16
      %117 = vsyncadd [#allocation5], %s116
      %s119 = sshll.u32 [#allocation4], 4
      %s120 = int_to_ptr.vmem [resolvable:$true] %s119
      %122 = dma.vmem_to_hbm [thread:$0]  %s120, 16, %s3, [#allocation5]
    $region25: #{tpu_custom_call.1} parent=1 // pred_fallthru
      _
    // Predicated region
    $region26: #{tpu_custom_call.1} parent=1 // pred_check
      _
    $region27: #{tpu_custom_call.1} parent=1 // pred_check_branch
      %124 = sbr.rel (0) target = $region29
    $region28: #{tpu_custom_call.1} parent=1 // pred_region
      %125 = dma.done [#allocation5], 16
    $region29: #{tpu_custom_call.1} parent=1 // pred_fallthru
      _
    %126 = vsyncpa [#allocation5], 1

</llo_original>
